<compile_context>
chip_gen: v6e
topology: v6e:2x2x1
jax: 0.10.0
libtpu: 0.0.40
codegen_flags: <defaults>
</compile_context>

<pallas_src>
import math
import functools

import jax
import jax.numpy as jnp
import numpy as np
from jax.experimental import pallas as pl
from jax.experimental.pallas import tpu as pltpu


# ----------------------------- in-kernel helpers -----------------------------

def _layernorm(x, g, b, eps):
    x = x.astype(jnp.float32)
    mu = jnp.mean(x, axis=-1, keepdims=True)
    xc = x - mu
    var = jnp.mean(xc * xc, axis=-1, keepdims=True)
    inv = jax.lax.rsqrt(var + eps)
    return xc * inv * g.astype(jnp.float32) + b.astype(jnp.float32)


def _erf(z):
    # Abramowitz & Stegun 7.1.26, |err| <= 1.5e-7 (effectively exact in f32).
    a1, a2, a3, a4, a5 = 0.254829592, -0.284496736, 1.421413741, -1.453152027, 1.061405429
    p = 0.3275911
    s = jnp.where(z >= 0.0, 1.0, -1.0)
    az = jnp.abs(z)
    t = 1.0 / (1.0 + p * az)
    poly = ((((a5 * t + a4) * t + a3) * t + a2) * t + a1) * t
    return s * (1.0 - poly * jnp.exp(-az * az))


def _gelu_exact(x):
    # Matches torch.nn.GELU() (erf form).
    return 0.5 * x * (1.0 + _erf(x * (1.0 / math.sqrt(2.0))))


# --------------------------------- kernels -----------------------------------

def _ln_qkv_kernel(x_ref, g_ref, b_ref, w_ref, bias_ref, o_ref, *, eps):
    # qkv = LayerNorm1(x) @ W_qkv + b_qkv      (one batch element per grid step)
    h = _layernorm(x_ref[0], g_ref[...], b_ref[...], eps)
    y = jnp.dot(h, w_ref[...].astype(jnp.float32),
                preferred_element_type=jnp.float32) + bias_ref[...].astype(jnp.float32)
    o_ref[0] = y.astype(o_ref.dtype)


def _attn_kernel(q_ref, k_ref, v_ref, o_ref, *, scale):
    # softmax(q k^T * scale) v for all heads of one batch element.
    q = q_ref[0].astype(jnp.float32)          # (nh, N, hd)
    k = k_ref[0].astype(jnp.float32)
    v = v_ref[0].astype(jnp.float32)
    s = jnp.einsum('hqd,hkd->hqk', q, k, preferred_element_type=jnp.float32) * scale
    s = s - jnp.max(s, axis=-1, keepdims=True)
    p = jnp.exp(s)
    p = p / jnp.sum(p, axis=-1, keepdims=True)
    o = jnp.einsum('hqk,hkd->hqd', p, v, preferred_element_type=jnp.float32)
    o_ref[0] = o.astype(o_ref.dtype)


def _proj_residual_kernel(x_ref, a_ref, w_ref, bias_ref, dp_ref, o_ref):
    # out = x + drop_path_scale[b] * (attn_out @ W_proj + b_proj)
    bi = pl.program_id(0)
    a = a_ref[0].astype(jnp.float32)
    y = jnp.dot(a, w_ref[...].astype(jnp.float32),
                preferred_element_type=jnp.float32) + bias_ref[...].astype(jnp.float32)
    scale = dp_ref[bi]                         # scalar read from SMEM
    o_ref[0] = (x_ref[0].astype(jnp.float32) + scale * y).astype(o_ref.dtype)


def _ln_mlp_residual_kernel(x_ref, g_ref, b_ref, w1_ref, b1_ref, w2_ref, b2_ref,
                            dp_ref, o_ref, *, eps):
    # out = x + drop_path_scale[b] * (GELU(LN2(x) @ W1 + b1) @ W2 + b2)
    bi = pl.program_id(0)
    x = x_ref[0].astype(jnp.float32)
    h = _layernorm(x, g_ref[...], b_ref[...], eps)
    z = jnp.dot(h, w1_ref[...].astype(jnp.float32),
                preferred_element_type=jnp.float32) + b1_ref[...].astype(jnp.float32)
    z = _gelu_exact(z)
    z = jnp.dot(z, w2_ref[...].astype(jnp.float32),
                preferred_element_type=jnp.float32) + b2_ref[...].astype(jnp.float32)
    o_ref[0] = (x + dp_ref[bi] * z).astype(o_ref.dtype)


# ------------------------------ BlockSpec helpers -----------------------------

def _batch_spec(shape):
    zeros = (0,) * len(shape)
    return pl.BlockSpec((1,) + tuple(shape), lambda b: (b,) + zeros)


def _const_spec(shape):
    zeros = (0,) * len(shape)
    return pl.BlockSpec(tuple(shape), lambda b: zeros)


_SMEM_SPEC = pl.BlockSpec(memory_space=pltpu.MemorySpace.SMEM)
_CP_PARALLEL = pltpu.CompilerParams(dimension_semantics=("parallel",))


# --------------------------------- forward -----------------------------------

def self_attention_block_forward(x, p, *, num_heads, attn_scale,
                                 drop_path_prob=0.0, training=False,
                                 scale_by_keep=True, rng=None, eps=1e-5):
    B, N, C = x.shape
    hd = C // num_heads
    H = p["w_fc1"].shape[1]
    f32 = jnp.float32

    # Per-sample stochastic-depth keep/scale vectors, drawn XLA-side (perf review #1):
    # the kernels only read a scalar from SMEM.
    if training and drop_path_prob > 0.0:
        if rng is None:
            rng = jax.random.PRNGKey(0)
        k1, k2 = jax.random.split(rng)
        keep = 1.0 - drop_path_prob

        def dp_scale(k):
            m = jax.random.bernoulli(k, keep, (B,)).astype(f32)
            return m / keep if (scale_by_keep and keep > 0.0) else m

        s1, s2 = dp_scale(k1), dp_scale(k2)
    else:
        s1 = s2 = jnp.ones((B,), f32)

    # 1) qkv = LN1(x) @ W_qkv + b_qkv
    qkv = pl.pallas_call(
        functools.partial(_ln_qkv_kernel, eps=eps),
        out_shape=jax.ShapeDtypeStruct((B, N, 3 * C), x.dtype),
        grid=(B,),
        in_specs=[
            _batch_spec((N, C)),
            _const_spec((1, C)), _const_spec((1, C)),
            _const_spec((C, 3 * C)), _const_spec((1, 3 * C)),
        ],
        out_specs=_batch_spec((N, 3 * C)),
        compiler_params=_CP_PARALLEL,
    )(x, p["ln1_g"], p["ln1_b"], p["w_qkv"], p["b_qkv"])

    # head split (layout plumbing, wrapper-side)
    qkv = qkv.reshape(B, N, 3, num_heads, hd).transpose(2, 0, 3, 1, 4)
    q, k, v = qkv[0], qkv[1], qkv[2]           # (B, nh, N, hd)

    # 2) multi-head attention, one batch element (all heads) per grid step
    attn = pl.pallas_call(
        functools.partial(_attn_kernel, scale=attn_scale),
        out_shape=jax.ShapeDtypeStruct((B, num_heads, N, hd), x.dtype),
        grid=(B,),
        in_specs=[_batch_spec((num_heads, N, hd))] * 3,
        out_specs=_batch_spec((num_heads, N, hd)),
        compiler_params=_CP_PARALLEL,
    )(q, k, v)

    a = attn.transpose(0, 2, 1, 3).reshape(B, N, C)   # head merge

    # 3) x = x + drop_path(proj(a))        (residual + DropPath fused into producer)
    x1 = pl.pallas_call(
        _proj_residual_kernel,
        out_shape=jax.ShapeDtypeStruct((B, N, C), x.dtype),
        grid=(B,),
        in_specs=[
            _batch_spec((N, C)), _batch_spec((N, C)),
            _const_spec((C, C)), _const_spec((1, C)),
            _SMEM_SPEC,
        ],
        out_specs=_batch_spec((N, C)),
        compiler_params=_CP_PARALLEL,
    )(x, a, p["w_proj"], p["b_proj"], s1)

    # 4) x = x + drop_path(mlp(LN2(x)))    (LN + fc1 + GELU + fc2 + residual fused)
    out = pl.pallas_call(
        functools.partial(_ln_mlp_residual_kernel, eps=eps),
        out_shape=jax.ShapeDtypeStruct((B, N, C), x.dtype),
        grid=(B,),
        in_specs=[
            _batch_spec((N, C)),
            _const_spec((1, C)), _const_spec((1, C)),
            _const_spec((C, H)), _const_spec((1, H)),
            _const_spec((H, C)), _const_spec((1, C)),
            _SMEM_SPEC,
        ],
        out_specs=_batch_spec((N, C)),
        compiler_params=_CP_PARALLEL,
    )(x1, p["ln2_g"], p["ln2_b"], p["w_fc1"], p["b_fc1"], p["w_fc2"], p["b_fc2"], s2)

    return out


# --------------------------------- module ------------------------------------

def _xavier_uniform(key, fan_in, fan_out, dtype=jnp.float32):
    limit = math.sqrt(6.0 / (fan_in + fan_out))
    return jax.random.uniform(key, (fan_in, fan_out), dtype, minval=-limit, maxval=limit)


class SelfAttentionBlock:
    """Mirror of the PyTorch SelfAttentionBlock (weights stored (in, out))."""

    def __init__(self, dim, num_heads=8, qkv_bias=False, qk_scale=None,
                 drop_path=0.0, mlp_ratio=4, scale_by_keep=True, key=None):
        assert dim % num_heads == 0
        head_dim = dim // num_heads
        self.dim = dim
        self.num_heads = num_heads
        self.attn_scale = qk_scale or head_dim ** (-0.5)
        self.drop_path_prob = float(drop_path)
        self.scale_by_keep = scale_by_keep
        self.training = True
        hidden = int(dim * mlp_ratio)

        key = key if key is not None else jax.random.PRNGKey(0)
        k_qkv, k_proj, k_fc1, k_fc2 = jax.random.split(key, 4)
        f32 = jnp.float32
        self.params = dict(
            ln1_g=jnp.ones((1, dim), f32), ln1_b=jnp.zeros((1, dim), f32),
            ln2_g=jnp.ones((1, dim), f32), ln2_b=jnp.zeros((1, dim), f32),
            w_qkv=_xavier_uniform(k_qkv, dim, 3 * dim),
            b_qkv=jnp.zeros((1, 3 * dim), f32),      # qkv_bias=False -> zeros
            w_proj=_xavier_uniform(k_proj, dim, dim),
            b_proj=jnp.zeros((1, dim), f32),
            w_fc1=_xavier_uniform(k_fc1, dim, hidden),
            b_fc1=jnp.zeros((1, hidden), f32),
            w_fc2=_xavier_uniform(k_fc2, hidden, dim),
            b_fc2=jnp.zeros((1, dim), f32),
        )

    def __call__(self, x, rng=None):
        return self_attention_block_forward(
            x, self.params,
            num_heads=self.num_heads, attn_scale=self.attn_scale,
            drop_path_prob=self.drop_path_prob, training=self.training,
            scale_by_keep=self.scale_by_keep, rng=rng)


# ------------------------------ pure-JAX reference ----------------------------

def _reference_forward(x, p, *, num_heads, attn_scale, eps=1e-5):
    def ln(t, g, b):
        mu = jnp.mean(t, -1, keepdims=True)
        var = jnp.mean((t - mu) ** 2, -1, keepdims=True)
        return (t - mu) / jnp.sqrt(var + eps) * g + b

    B, N, C = x.shape
    hd = C // num_heads
    h = ln(x, p["ln1_g"][0], p["ln1_b"][0])
    qkv = h @ p["w_qkv"] + p["b_qkv"][0]
    qkv = qkv.reshape(B, N, 3, num_heads, hd).transpose(2, 0, 3, 1, 4)
    q, k, v = qkv[0], qkv[1], qkv[2]
    attn = jax.nn.softmax(jnp.einsum('bhqd,bhkd->bhqk', q, k) * attn_scale, axis=-1)
    a = jnp.einsum('bhqk,bhkd->bhqd', attn, v).transpose(0, 2, 1, 3).reshape(B, N, C)
    x = x + (a @ p["w_proj"] + p["b_proj"][0])
    h = ln(x, p["ln2_g"][0], p["ln2_b"][0])
    z = h @ p["w_fc1"] + p["b_fc1"][0]
    z = 0.5 * z * (1.0 + jax.scipy.special.erf(z / jnp.sqrt(2.0).astype(z.dtype)))
    z = z @ p["w_fc2"] + p["b_fc2"][0]
    return x + z


# ----------------------------------- main -------------------------------------

if __name__ == "__main__":
    key = jax.random.PRNGKey(0)
    kx, kp, kdp = jax.random.split(key, 3)

    B, N, dim, heads = 2, 8, 32, 4
    x = jax.random.normal(kx, (B, N, dim), dtype=jnp.float32)

    # Deterministic forward (drop_path=0.0 -> Identity, dropouts p=0.0), as in eval.
    block = SelfAttentionBlock(dim, num_heads=heads, drop_path=0.0, key=kp)
    block.training = False
    out = jax.block_until_ready(block(x))
    assert out.shape == x.shape

    ref = jax.block_until_ready(
        _reference_forward(x, block.params, num_heads=heads, attn_scale=block.attn_scale))
    assert np.allclose(np.asarray(out), np.asarray(ref), rtol=2e-2, atol=2e-2), (
        "Pallas SelfAttentionBlock does not match JAX reference")

    # Exercise the stochastic-depth (training) path: per-sample scale in SMEM.
    block_dp = SelfAttentionBlock(dim, num_heads=heads, drop_path=0.5, key=kp)
    block_dp.training = True
    out_dp = jax.block_until_ready(block_dp(x, rng=kdp))
    assert out_dp.shape == x.shape
    assert np.all(np.isfinite(np.asarray(out_dp)))

    print("KERNEL_OK")
</pallas_src>

<mosaic_0001>
module attributes {stable_mosaic.version = 11 : i64} {
  func.func @_ln_qkv_kernel(%arg0: i32, %arg1: memref<1x8x32xf32, #tpu.memory_space<vmem>>, %arg2: memref<1x32xf32, #tpu.memory_space<vmem>>, %arg3: memref<1x32xf32, #tpu.memory_space<vmem>>, %arg4: memref<32x96xf32, #tpu.memory_space<vmem>>, %arg5: memref<1x96xf32, #tpu.memory_space<vmem>>, %arg6: memref<1x8x96xf32, #tpu.memory_space<vmem>>) attributes {dimension_semantics = [#tpu.dimension_semantics<parallel>], iteration_bounds = array<i64: 2>, scalar_prefetch = 0 : i64, scratch_operands = 0 : i64, tpu.core_type = #tpu.core_type<tc>, window_params = [{transform_indices = @transform_0, window_bounds = array<i64: 1, 8, 32>}, {pipeline_mode = #tpu.pipeline_mode<synchronous>, transform_indices = @transform_1, window_bounds = array<i64: 1, 32>}, {pipeline_mode = #tpu.pipeline_mode<synchronous>, transform_indices = @transform_2, window_bounds = array<i64: 1, 32>}, {pipeline_mode = #tpu.pipeline_mode<synchronous>, transform_indices = @transform_3, window_bounds = array<i64: 32, 96>}, {pipeline_mode = #tpu.pipeline_mode<synchronous>, transform_indices = @transform_4, window_bounds = array<i64: 1, 96>}, {transform_indices = @transform_5, window_bounds = array<i64: 1, 8, 96>}]} {
    %c0 = arith.constant 0 : index
    %c0_0 = arith.constant 0 : index
    %c0_1 = arith.constant 0 : index
    %0 = vector.load %arg1[%c0, %c0_0, %c0_1] : memref<1x8x32xf32, #tpu.memory_space<vmem>>, vector<1x8x32xf32>
    %1 = vector.shape_cast %0 : vector<1x8x32xf32> to vector<8x32xf32>
    %c0_2 = arith.constant 0 : index
    %c0_3 = arith.constant 0 : index
    %2 = vector.load %arg2[%c0_2, %c0_3] : memref<1x32xf32, #tpu.memory_space<vmem>>, vector<1x32xf32>
    %c0_4 = arith.constant 0 : index
    %c0_5 = arith.constant 0 : index
    %3 = vector.load %arg3[%c0_4, %c0_5] : memref<1x32xf32, #tpu.memory_space<vmem>>, vector<1x32xf32>
    %cst = arith.constant dense<0.000000e+00> : vector<8xf32>
    %4 = vector.multi_reduction <add>, %1, %cst [1] : vector<8x32xf32> to vector<8xf32>
    %5 = vector.shape_cast %4 : vector<8xf32> to vector<8x1xf32>
    %cst_6 = arith.constant 3.200000e+01 : f32
    %6 = vector.broadcast %cst_6 : f32 to vector<8x1xf32>
    %7 = arith.divf %5, %6 : vector<8x1xf32>
    %8 = vector.broadcast %7 : vector<8x1xf32> to vector<8x32xf32>
    %9 = arith.subf %1, %8 : vector<8x32xf32>
    %10 = arith.mulf %9, %9 : vector<8x32xf32>
    %cst_7 = arith.constant dense<0.000000e+00> : vector<8xf32>
    %11 = vector.multi_reduction <add>, %10, %cst_7 [1] : vector<8x32xf32> to vector<8xf32>
    %12 = vector.shape_cast %11 : vector<8xf32> to vector<8x1xf32>
    %cst_8 = arith.constant 3.200000e+01 : f32
    %13 = vector.broadcast %cst_8 : f32 to vector<8x1xf32>
    %14 = arith.divf %12, %13 : vector<8x1xf32>
    %cst_9 = arith.constant 9.99999974E-6 : f32
    %15 = vector.broadcast %cst_9 : f32 to vector<8x1xf32>
    %16 = arith.addf %14, %15 : vector<8x1xf32>
    %17 = math.rsqrt %16 : vector<8x1xf32>
    %18 = vector.broadcast %17 : vector<8x1xf32> to vector<8x32xf32>
    %19 = arith.mulf %9, %18 : vector<8x32xf32>
    %20 = vector.broadcast %2 : vector<1x32xf32> to vector<8x32xf32>
    %21 = arith.mulf %19, %20 : vector<8x32xf32>
    %22 = vector.broadcast %3 : vector<1x32xf32> to vector<8x32xf32>
    %23 = arith.addf %21, %22 : vector<8x32xf32>
    %c0_10 = arith.constant 0 : index
    %c0_11 = arith.constant 0 : index
    %24 = vector.load %arg4[%c0_10, %c0_11] : memref<32x96xf32, #tpu.memory_space<vmem>>, vector<32x96xf32>
    %cst_12 = arith.constant dense<0.000000e+00> : vector<8x96xf32>
    %25 = tpu.matmul %23, %24, %cst_12 {dimension_numbers = #tpu.dot_dimension_numbers<[1], [0], [0], [1], [0, 0, 1, 1], [], []>} : vector<8x32xf32>, vector<32x96xf32>, vector<8x96xf32> -> vector<8x96xf32>
    %c0_13 = arith.constant 0 : index
    %c0_14 = arith.constant 0 : index
    %26 = vector.load %arg5[%c0_13, %c0_14] : memref<1x96xf32, #tpu.memory_space<vmem>>, vector<1x96xf32>
    %27 = vector.broadcast %26 : vector<1x96xf32> to vector<8x96xf32>
    %28 = arith.addf %25, %27 : vector<8x96xf32>
    %c0_15 = arith.constant 0 : index
    %c0_16 = arith.constant 0 : index
    %c0_17 = arith.constant 0 : index
    %29 = vector.load %arg6[%c0_15, %c0_16, %c0_17] : memref<1x8x96xf32, #tpu.memory_space<vmem>>, vector<1x8x96xf32>
    %30 = vector.shape_cast %29 : vector<1x8x96xf32> to vector<8x96xf32>
    %31 = vector.shape_cast %28 : vector<8x96xf32> to vector<1x8x96xf32>
    tpu.vector_store %arg6[%c0_15, %c0_16, %c0_17], %31 {strides = array<i32>} : memref<1x8x96xf32, #tpu.memory_space<vmem>>, vector<1x8x96xf32>,
    return
  }
  func.func @transform_0(%arg0: i32) -> (i32, i32, i32) {
    %c0_i32 = arith.constant 0 : i32
    %c0_i32_0 = arith.constant 0 : i32
    %c0_i32_1 = arith.constant 0 : i32
    return %arg0, %c0_i32, %c0_i32_0 : i32, i32, i32
  }
  func.func @transform_1(%arg0: i32) -> (i32, i32) {
    %c0_i32 = arith.constant 0 : i32
    %c0_i32_0 = arith.constant 0 : i32
    %c0_i32_1 = arith.constant 0 : i32
    return %c0_i32, %c0_i32_0 : i32, i32
  }
  func.func @transform_2(%arg0: i32) -> (i32, i32) {
    %c0_i32 = arith.constant 0 : i32
    %c0_i32_0 = arith.constant 0 : i32
    %c0_i32_1 = arith.constant 0 : i32
    return %c0_i32, %c0_i32_0 : i32, i32
  }
  func.func @transform_3(%arg0: i32) -> (i32, i32) {
    %c0_i32 = arith.constant 0 : i32
    %c0_i32_0 = arith.constant 0 : i32
    %c0_i32_1 = arith.constant 0 : i32
    return %c0_i32, %c0_i32_0 : i32, i32
  }
  func.func @transform_4(%arg0: i32) -> (i32, i32) {
    %c0_i32 = arith.constant 0 : i32
    %c0_i32_0 = arith.constant 0 : i32
    %c0_i32_1 = arith.constant 0 : i32
    return %c0_i32, %c0_i32_0 : i32, i32
  }
  func.func @transform_5(%arg0: i32) -> (i32, i32, i32) {
    %c0_i32 = arith.constant 0 : i32
    %c0_i32_0 = arith.constant 0 : i32
    %c0_i32_1 = arith.constant 0 : i32
    return %arg0, %c0_i32, %c0_i32_0 : i32, i32, i32
  }
}

</mosaic_0001>

<llo_original>
// kernel: tpu_custom_call.1
$region0: #{tpu_custom_call.1}
  #allocation0 [shape = 'u32[]', space=smem, size = 0x4, offset = 0x4, fixed_abs, tag = 'smem constant byte address 0x4 - core index']
  #allocation1 [shape = 'u32[144,128]{1,0:T(1,128)}', space=vmem, size = 0x12000, scoped, tag = 'internal scratch']
  %s0 = inlined_call_operand.hbm [shape: f32[2,8,32], index: 0, kind: input, shape index: {}]
  %s1 = inlined_call_operand.vmem [shape: f32[1,32], index: 1, kind: input, shape index: {}]
  %s2 = inlined_call_operand.vmem [shape: f32[1,32], index: 2, kind: input, shape index: {}]
  %s3 = inlined_call_operand.hbm [shape: f32[32,96], index: 3, kind: input, shape index: {}]
  %s4 = inlined_call_operand.vmem [shape: f32[1,96], index: 4, kind: input, shape index: {}]
  %s5 = inlined_call_operand.hbm [shape: f32[2,8,96], index: 5, kind: output, shape index: {}]
  %s6 = sld [smem:[#allocation0]]
  $region61: #{tpu_custom_call.1} parent=0
    _
  %s8 = ssub.s32 1, %s6
  %s9 = scalar_select 0, %s8, %s6
  $region1: #{tpu_custom_call.1} parent=0
    #allocation2 [shape = 'u8[8192]{0}', space=vmem, size = 0x2000, scoped, tag = 'input window, operand 0']
    #allocation3 [shape = 's32[2]{0}', space=sflag, size = 0x8, scoped, tag = 'scoped memory for tpu_custom_call.1']
    #allocation4 [shape = 's32[2]{0}', space=sflag, size = 0x8, scoped, tag = 'scoped memory for tpu_custom_call.1']
    #allocation5 [shape = 'u8[16384]{0}', space=vmem, size = 0x4000, scoped, tag = 'input window, operand 3, single buffered']
    #allocation6 [shape = 's32[1]{0}', space=sflag, size = 0x4, scoped, tag = 'scoped memory for tpu_custom_call.1']
    #allocation7 [shape = 'u8[8192]{0}', space=vmem, size = 0x2000, scoped, tag = 'output window, operand 0']
    %10 = vsyncpa [#allocation3], 0
    %s11 = scalar_lea.sflag [#allocation3], 1
    %12 = vsyncpa %s11, 0
    %13 = vsyncpa [#allocation6], 0
    %14 = vsyncpa [#allocation4], 0
    %s15 = scalar_lea.sflag [#allocation4], 1
    %16 = vsyncpa %s15, 0
    loop: start=0, step=1, limit=4
    $region2: #{tpu_custom_call.1} parent=1 // loop_pre_header
      _
    $region3: #{tpu_custom_call.1} parent=1 // loop_header
      %s18 = sphi 0, %s22
      %p19 = scmp.ge.s32.totalorder %s18, 4
      %s28 = sphi 0, %s30
      %s31 = sphi 0, %s28
      %s32 = sphi 0, %s31
      %s48 = sphi 0, %s32
      %s52 = sphi 0, %s52
      %s54 = sphi 0, %s52
      %s55 = sphi 0, %s54
      %s69 = sphi 0, %s55
      %s73 = sphi 0, %s73
      %s75 = sphi 0, %s73
      %s76 = sphi 0, %s75
      %s90 = sphi 0, %s76
      %s94 = sphi 0, %s94
      %s96 = sphi 0, %s94
      %s97 = sphi 0, %s96
      %s111 = sphi 0, %s97
      %s115 = sphi 0, %s115
      %s117 = sphi 0, %s115
      %s118 = sphi 0, %s117
      %s132 = sphi 0, %s118
      %s138 = sphi 0, %s140
      %s141 = sphi 0, %s138
      %s142 = sphi 0, %s141
      %s158 = sphi 0, %s142
    $region4: #{tpu_custom_call.1} parent=1 // loop_header_branch
      %21 = sbr.rel (%p19) target = $region8
    $region5: #{tpu_custom_call.1} parent=1 // loop_body
      %s23 = ssub.s32 %s18, 1
      %s24 = ssub.s32 %s18, 2
      %s25 = sadd.s32 %s18, 1
      %s26 = ssub.s32 %s18, %s25
      %p27 = scmp.eq.s32.totalorder %s26, 0
      %s29 = sadd.s32 %s28, 1
      %s30 = scalar_select %p27, %s28, %s29
      %p33 = pneg %p27
      %p34 = scmp.eq.s32.totalorder %s18, 1
      %p35 = por %p33, %p34
      %p36 = scmp.ne.s32.totalorder %s28, %s31
      %p37 = scmp.eq.s32.totalorder %s18, 0
      %p38 = por %p36, %p37
      %p39 = scmp.ne.s32.totalorder %s28, %s31
      %p40 = scmp.eq.s32.totalorder %s23, 1
      %p41 = por %p39, %p40
      %p42 = scmp.ne.s32.totalorder %s31, %s32
      %p43 = scmp.eq.s32.totalorder %s23, 0
      %p44 = por %p42, %p43
      %p45 = scmp.ne.s32.totalorder %s31, %s32
      %p46 = scmp.eq.s32.totalorder %s24, 1
      %p47 = por %p45, %p46
      %p49 = scmp.ne.s32.totalorder %s32, %s48
      %p50 = scmp.eq.s32.totalorder %s24, 0
      %p51 = por %p49, %p50
      %s53 = sadd.s32 %s52, 1
      %p56 = scmp.eq.s32.totalorder %s18, 1
      %p57 = scmp.ne.s32.totalorder %s52, %s54
      %p58 = scmp.eq.s32.totalorder %s18, 0
      %p59 = por %p57, %p58
      %p60 = scmp.ne.s32.totalorder %s52, %s54
      %p61 = scmp.eq.s32.totalorder %s23, 1
      %p62 = por %p60, %p61
      %p63 = scmp.ne.s32.totalorder %s54, %s55
      %p64 = scmp.eq.s32.totalorder %s23, 0
      %p65 = por %p63, %p64
      %p66 = scmp.ne.s32.totalorder %s54, %s55
      %p67 = scmp.eq.s32.totalorder %s24, 1
      %p68 = por %p66, %p67
      %p70 = scmp.ne.s32.totalorder %s55, %s69
      %p71 = scmp.eq.s32.totalorder %s24, 0
      %p72 = por %p70, %p71
      %s74 = sadd.s32 %s73, 1
      %p77 = scmp.eq.s32.totalorder %s18, 1
      %p78 = scmp.ne.s32.totalorder %s73, %s75
      %p79 = scmp.eq.s32.totalorder %s18, 0
      %p80 = por %p78, %p79
      %p81 = scmp.ne.s32.totalorder %s73, %s75
      %p82 = scmp.eq.s32.totalorder %s23, 1
      %p83 = por %p81, %p82
      %p84 = scmp.ne.s32.totalorder %s75, %s76
      %p85 = scmp.eq.s32.totalorder %s23, 0
      %p86 = por %p84, %p85
      %p87 = scmp.ne.s32.totalorder %s75, %s76
      %p88 = scmp.eq.s32.totalorder %s24, 1
      %p89 = por %p87, %p88
      %p91 = scmp.ne.s32.totalorder %s76, %s90
      %p92 = scmp.eq.s32.totalorder %s24, 0
      %p93 = por %p91, %p92
      %s95 = sadd.s32 %s94, 1
      %p98 = scmp.eq.s32.totalorder %s18, 1
      %p99 = scmp.ne.s32.totalorder %s94, %s96
      %p100 = scmp.eq.s32.totalorder %s18, 0
      %p101 = por %p99, %p100
      %p102 = scmp.ne.s32.totalorder %s94, %s96
      %p103 = scmp.eq.s32.totalorder %s23, 1
      %p104 = por %p102, %p103
      %p105 = scmp.ne.s32.totalorder %s96, %s97
      %p106 = scmp.eq.s32.totalorder %s23, 0
      %p107 = por %p105, %p106
      %p108 = scmp.ne.s32.totalorder %s96, %s97
      %p109 = scmp.eq.s32.totalorder %s24, 1
      %p110 = por %p108, %p109
      %p112 = scmp.ne.s32.totalorder %s97, %s111
      %p113 = scmp.eq.s32.totalorder %s24, 0
      %p114 = por %p112, %p113
      %s116 = sadd.s32 %s115, 1
      %p119 = scmp.eq.s32.totalorder %s18, 1
      %p120 = scmp.ne.s32.totalorder %s115, %s117
      %p121 = scmp.eq.s32.totalorder %s18, 0
      %p122 = por %p120, %p121
      %p123 = scmp.ne.s32.totalorder %s115, %s117
      %p124 = scmp.eq.s32.totalorder %s23, 1
      %p125 = por %p123, %p124
      %p126 = scmp.ne.s32.totalorder %s117, %s118
      %p127 = scmp.eq.s32.totalorder %s23, 0
      %p128 = por %p126, %p127
      %p129 = scmp.ne.s32.totalorder %s117, %s118
      %p130 = scmp.eq.s32.totalorder %s24, 1
      %p131 = por %p129, %p130
      %p133 = scmp.ne.s32.totalorder %s118, %s132
      %p134 = scmp.eq.s32.totalorder %s24, 0
      %p135 = por %p133, %p134
      %s136 = ssub.s32 %s18, %s25
      %p137 = scmp.eq.s32.totalorder %s136, 0
      %s139 = sadd.s32 %s138, 1
      %s140 = scalar_select %p137, %s138, %s139
      %p143 = pneg %p137
      %p144 = scmp.eq.s32.totalorder %s18, 1
      %p145 = por %p143, %p144
      %p146 = scmp.ne.s32.totalorder %s138, %s141
      %p147 = scmp.eq.s32.totalorder %s18, 0
      %p148 = por %p146, %p147
      %p149 = scmp.ne.s32.totalorder %s138, %s141
      %p150 = scmp.eq.s32.totalorder %s23, 1
      %p151 = por %p149, %p150
      %p152 = scmp.ne.s32.totalorder %s141, %s142
      %p153 = scmp.eq.s32.totalorder %s23, 0
      %p154 = por %p152, %p153
      %p155 = scmp.ne.s32.totalorder %s141, %s142
      %p156 = scmp.eq.s32.totalorder %s24, 1
      %p157 = por %p155, %p156
      %p159 = scmp.ne.s32.totalorder %s142, %s158
      %p160 = scmp.eq.s32.totalorder %s24, 0
      %p161 = por %p159, %p160
      %p162 = scmp.le.s32.totalorder 1, %s18
      %p163 = scmp.lt.s32.totalorder %s18, 3
      %p164 = pnand %p162, %p163
      %p165 = pneg %p164
      // Predicated region
      $region9: #{tpu_custom_call.1} parent=5 // pred_check
        _
      $region10: #{tpu_custom_call.1} parent=5 // pred_check_branch
        %167 = sbr.rel (%p164) target = $region12
      $region11: #{tpu_custom_call.1} parent=5 // pred_region
        %s168 = ssub.s32 %s18, 1
        // Predicated region
        $region13: #{tpu_custom_call.1} parent=11 // pred_check
          %p169 = pneg %p65
        $region14: #{tpu_custom_call.1} parent=11 // pred_check_branch
          %171 = sbr.rel (%p169) target = $region16
        $region15: #{tpu_custom_call.1} parent=11 // pred_region
          _
        $region16: #{tpu_custom_call.1} parent=11 // pred_fallthru
          _
        // Predicated region
        $region17: #{tpu_custom_call.1} parent=11 // pred_check
          %p172 = pneg %p86
        $region18: #{tpu_custom_call.1} parent=11 // pred_check_branch
          %174 = sbr.rel (%p172) target = $region20
        $region19: #{tpu_custom_call.1} parent=11 // pred_region
          _
        $region20: #{tpu_custom_call.1} parent=11 // pred_fallthru
          _
        // Predicated region
        $region21: #{tpu_custom_call.1} parent=11 // pred_check
          %p175 = pneg %p107
        $region22: #{tpu_custom_call.1} parent=11 // pred_check_branch
          %177 = sbr.rel (%p175) target = $region24
        $region23: #{tpu_custom_call.1} parent=11 // pred_region
          %s179 = ssub.s32 512, 512
          %180 = vsyncadd [#allocation6], %s179
          %s181 = sshll.u32 [#allocation5], 4
          %s182 = int_to_ptr.vmem [resolvable:$true] %s181
          %187 = dma.hbm_to_vmem [thread:$0]  %s3, 512, %s182, [#allocation6], 128, 128, 8
        $region24: #{tpu_custom_call.1} parent=11 // pred_fallthru
          _
        // Predicated region
        $region25: #{tpu_custom_call.1} parent=11 // pred_check
          %p188 = pneg %p128
        $region26: #{tpu_custom_call.1} parent=11 // pred_check_branch
          %190 = sbr.rel (%p188) target = $region28
        $region27: #{tpu_custom_call.1} parent=11 // pred_region
          _
        $region28: #{tpu_custom_call.1} parent=11 // pred_fallthru
          _
      $region12: #{tpu_custom_call.1} parent=5 // pred_fallthru
        _
      %p191 = scmp.lt.s32.totalorder %s18, 2
      // Predicated region
      $region29: #{tpu_custom_call.1} parent=5 // pred_check
        %p192 = pneg %p191
      $region30: #{tpu_custom_call.1} parent=5 // pred_check_branch
        %194 = sbr.rel (%p192) target = $region32
      $region31: #{tpu_custom_call.1} parent=5 // pred_region
        // Predicated region
        $region33: #{tpu_custom_call.1} parent=31 // pred_check
          %p195 = pneg %p38
        $region34: #{tpu_custom_call.1} parent=31 // pred_check_branch
          %197 = sbr.rel (%p195) target = $region36
        $region35: #{tpu_custom_call.1} parent=31 // pred_region
          %s198 = sand.u32 %s28, 1
          %s199 = scalar_lea.sflag [#allocation3], %s198
          %s200 = sand.u32 %s28, 1
          %s201 = smul.addr %s200, 8
          %s202 = scalar_lea.vmem [#allocation2], %s201
          %s204 = ssub.s32 128, 128
          %205 = vsyncadd %s199, %s204
          %s206 = smul.addr %s18, 128
          %s207 = scalar_lea.hbm %s0, %s206
          %s209 = sshll.u32 %s202, 4
          %s210 = int_to_ptr.vmem [resolvable:$true] %s209
          %212 = dma.hbm_to_vmem [thread:$0]  %s207, 128, %s210, %s199
        $region36: #{tpu_custom_call.1} parent=31 // pred_fallthru
          _
      $region32: #{tpu_custom_call.1} parent=5 // pred_fallthru
        _
      %p213 = scmp.le.s32.totalorder 1, %s18
      %p214 = scmp.lt.s32.totalorder %s18, 3
      %p215 = pnand %p213, %p214
      %p216 = pneg %p215
      // Predicated region
      $region37: #{tpu_custom_call.1} parent=5 // pred_check
        _
      $region38: #{tpu_custom_call.1} parent=5 // pred_check_branch
        %218 = sbr.rel (%p215) target = $region40
      $region39: #{tpu_custom_call.1} parent=5 // pred_region
        %s219 = ssub.s32 %s18, 1
        %s220 = sand.u32 %s31, 1
        %s221 = scalar_lea.sflag [#allocation3], %s220
        %s222 = sand.u32 %s31, 1
        %s223 = smul.addr %s222, 8
        %s224 = scalar_lea.vmem [#allocation2], %s223
        // Predicated region
        $region41: #{tpu_custom_call.1} parent=39 // pred_check
          %p225 = pneg %p44
        $region42: #{tpu_custom_call.1} parent=39 // pred_check_branch
          %227 = sbr.rel (%p225) target = $region44
        $region43: #{tpu_custom_call.1} parent=39 // pred_region
          %228 = dma.done %s221, 128
        $region44: #{tpu_custom_call.1} parent=39 // pred_fallthru
          _
        // Predicated region
        $region45: #{tpu_custom_call.1} parent=39 // pred_check
          %p229 = pneg %p107
        $region46: #{tpu_custom_call.1} parent=39 // pred_check_branch
          %231 = sbr.rel (%p229) target = $region48
        $region47: #{tpu_custom_call.1} parent=39 // pred_region
          %232 = dma.done [#allocation6], 512
        $region48: #{tpu_custom_call.1} parent=39 // pred_fallthru
          _
        %s233 = sand.u32 %s31, 1
        %s234 = scalar_lea.sflag [#allocation3], %s233
        %s235 = sand.u32 %s31, 1
        %s236 = smul.addr %s235, 8
        %s237 = scalar_lea.vmem [#allocation2], %s236
        %p238 = pneg %p44
        %p239 = pneg %p41
        %p240 = pneg %p65
        %p241 = pneg %p62
        %p242 = pneg %p86
        %p243 = pneg %p83
        %p244 = pneg %p107
        %p245 = pneg %p104
        %p246 = pneg %p128
        %p247 = pneg %p125
        %p248 = pneg %p154
        %p249 = pneg %p151
        %s250 = sand.u32 %s141, 1
        %s251 = scalar_lea.sflag [#allocation4], %s250
        %s252 = sand.u32 %s141, 1
        %s253 = smul.addr %s252, 8
        %s254 = scalar_lea.vmem [#allocation7], %s253
        %v255 = vld [vmem:[%s224] sm:$0xff]
        %v256 = vld [vmem:[%s1] sm:$0x1]
        %v257 = vld [vmem:[%s2] sm:$0x1]
        %vm258 = vcmask 261120
        %v259 = vsel %vm258, %v255, 0.0
        %260 = vadd.xlane.f32.xlu0 %v259
        %v261 = vpop.xlane.xlu0 %260
        %v262 = vrcp.pop 32.0
        %v263 = vmul.f32 %v261, %v262
        %v264 = vsub.f32 %v255, %v263
        %v265 = vmul.f32 %v264, %v264
        %v266 = vsel %vm258, %v265, 0.0
        %267 = vadd.xlane.f32.xlu0 %v266
        %v268 = vpop.xlane.xlu0 %267
        %v269 = vmul.f32 %v268, %v262
        %v270 = vadd.f32 %v269, 1e-05
        %v271 = vrsqrt.pop %v270
        %v272 = vmul.f32 %v264, %v271
        %v274 = vlaneseq
        %v275 = vshrl.u32 %v274, 7
        %v276 = vsub.s32 0, %v275
        %v277 = vrot.slane %v256, %v276
        %v279 = vmul.f32 %v272, %v277
        %v281 = vlaneseq
        %v282 = vshrl.u32 %v281, 7
        %v283 = vsub.s32 0, %v282
        %v284 = vrot.slane %v257, %v283
        %v286 = vadd.f32 %v279, %v284
        %v287 = vld [vmem:[#allocation5] sm:$0xff]
        %v288 = vld [vmem:[#allocation5 + $0x8] sm:$0xff]
        %v289 = vld [vmem:[#allocation5 + $0x10] sm:$0xff]
        %v290 = vld [vmem:[#allocation5 + $0x18] sm:$0xff]
        %v291 = vld [vmem:[%s4] sm:$0x1]
        %v293 = vlaneseq
        %v294 = vshrl.u32 %v293, 7
        %v295 = vsub.s32 0, %v294
        %v296 = vrot.slane %v291, %v295
        %v299 = vsel %vm258, %v286, 0
        %301 = vmatprep.subr.mxu0 0.0
        %302 = vmatpush1.msra.mxu0 0.0
        %303 = vmatprep.subr.mxu0 0.0
        %304 = vmatpush1.msra.mxu0 0.0
        %305 = vmatprep.subr.mxu0 0.0
        %306 = vmatpush1.msra.mxu0 0.0
        %307 = vmatprep.subr.mxu0 0.0
        %308 = vmatpush1.msra.mxu0 0.0
        %309 = vmatprep.subr.mxu0 0.0
        %310 = vmatpush1.msra.mxu0 0.0
        %311 = vmatprep.subr.mxu0 0.0
        %312 = vmatpush1.msra.mxu0 0.0
        %313 = vmatprep.subr.mxu0 0.0
        %314 = vmatpush1.msra.mxu0 0.0
        %315 = vmatprep.subr.mxu0 0.0
        %316 = vmatpush1.msra.mxu0 0.0
        %317 = vmatprep.subr.mxu0 0.0
        %318 = vmatpush1.msra.mxu0 0.0
        %319 = vmatprep.subr.mxu0 0.0
        %320 = vmatpush1.msra.mxu0 0.0
        %321 = vmatprep.subr.mxu0 0.0
        %322 = vmatpush1.msra.mxu0 0.0
        %323 = vmatprep.subr.mxu0 0.0
        %324 = vmatpush1.msra.mxu0 0.0
        %325 = vmatprep.subr.mxu0 0.0
        %326 = vmatpush1.msra.mxu0 %v290
        %327 = vmatprep.subr.mxu0 0.0
        %328 = vmatpush1.msra.mxu0 %v289
        %329 = vmatprep.subr.mxu0 0.0
        %330 = vmatpush1.msra.mxu0 %v288
        %331 = vmatprep.subr.mxu0 0.0
        %332 = vmatpush1.msra.mxu0 %v287
        %333 = vmatprep.subr.mxu0 0.0
        %334 = vmatpush2.msra.mxu0 0.0
        %335 = vmatprep.subr.mxu0 0.0
        %336 = vmatpush2.msra.mxu0 0.0
        %337 = vmatprep.subr.mxu0 0.0
        %338 = vmatpush2.msra.mxu0 0.0
        %339 = vmatprep.subr.mxu0 0.0
        %340 = vmatpush2.msra.mxu0 0.0
        %341 = vmatprep.subr.mxu0 0.0
        %342 = vmatpush2.msra.mxu0 0.0
        %343 = vmatprep.subr.mxu0 0.0
        %344 = vmatpush2.msra.mxu0 0.0
        %345 = vmatprep.subr.mxu0 0.0
        %346 = vmatpush2.msra.mxu0 0.0
        %347 = vmatprep.subr.mxu0 0.0
        %348 = vmatpush2.msra.mxu0 0.0
        %349 = vmatprep.subr.mxu0 0.0
        %350 = vmatpush2.msra.mxu0 0.0
        %351 = vmatprep.subr.mxu0 0.0
        %352 = vmatpush2.msra.mxu0 0.0
        %353 = vmatprep.subr.mxu0 0.0
        %354 = vmatpush2.msra.mxu0 0.0
        %355 = vmatprep.subr.mxu0 0.0
        %356 = vmatpush2.msra.mxu0 0.0
        %357 = vmatprep.subr.mxu0 0.0
        %358 = vmatpush2.msra.mxu0 0.0
        %359 = vmatprep.subr.mxu0 0.0
        %360 = vmatpush2.msra.mxu0 0.0
        %361 = vmatprep.subr.mxu0 0.0
        %362 = vmatpush2.msra.mxu0 0.0
        %363 = vmatprep.subr.mxu0 0.0
        %364 = vmatpush2.msra.mxu0 0.0
        %365 = vmatprep.mubr.f32.mxu0 0.0
        %366 = vmatmul.mubr.f32.gmra.mxu0 %v299
        %v367 = vpop.f32.mrf.mxu0
        %v368 = vadd.f32 %v296, %v367
        %v369 = vpop.f32.mrf.mxu0
        %370 = vdwg.mxu0
        %vm371 = vcmask 785408
        %372 = vst.msk [vmem:[%s254] sm:$0xff] %vm371, %v368
        %s373 = sand.u32 %s141, 1
        %s374 = scalar_lea.sflag [#allocation4], %s373
        %s375 = sand.u32 %s141, 1
        %s376 = smul.addr %s375, 8
        %s377 = scalar_lea.vmem [#allocation7], %s376
        // Predicated region
        $region49: #{tpu_custom_call.1} parent=39 // pred_check
          %p378 = pneg %p151
        $region50: #{tpu_custom_call.1} parent=39 // pred_check_branch
          %380 = sbr.rel (%p378) target = $region52
        $region51: #{tpu_custom_call.1} parent=39 // pred_region
          %s382 = ssub.s32 128, 128
          %383 = vsyncadd %s374, %s382
          %s384 = smul.addr %s23, 128
          %s385 = scalar_lea.hbm %s5, %s384
          %s387 = sshll.u32 %s377, 4
          %s388 = int_to_ptr.vmem [resolvable:$true] %s387
          %390 = dma.vmem_to_hbm [thread:$0]  %s388, 128, %s385, %s374
        $region52: #{tpu_custom_call.1} parent=39 // pred_fallthru
          _
      $region40: #{tpu_custom_call.1} parent=5 // pred_fallthru
        _
      %p391 = scmp.le.s32.totalorder 2, %s18
      // Predicated region
      $region53: #{tpu_custom_call.1} parent=5 // pred_check
        %p392 = pneg %p391
      $region54: #{tpu_custom_call.1} parent=5 // pred_check_branch
        %394 = sbr.rel (%p392) target = $region56
      $region55: #{tpu_custom_call.1} parent=5 // pred_region
        %s395 = ssub.s32 %s18, 2
        // Predicated region
        $region57: #{tpu_custom_call.1} parent=55 // pred_check
          %p396 = pneg %p157
        $region58: #{tpu_custom_call.1} parent=55 // pred_check_branch
          %398 = sbr.rel (%p396) target = $region60
        $region59: #{tpu_custom_call.1} parent=55 // pred_region
          %s399 = sand.u32 %s142, 1
          %s400 = scalar_lea.sflag [#allocation4], %s399
          %s401 = sand.u32 %s142, 1
          %s402 = smul.addr %s401, 8
          %s403 = scalar_lea.vmem [#allocation7], %s402
          %404 = dma.done %s400, 128
        $region60: #{tpu_custom_call.1} parent=55 // pred_fallthru
          _
      $region56: #{tpu_custom_call.1} parent=5 // pred_fallthru
        _
    $region6: #{tpu_custom_call.1} parent=1 // loop_footer
      %s22 = sadd.s32 1, %s18
    $region7: #{tpu_custom_call.1} parent=1 // loop_footer_branch
      %17 = sbr.rel target = $region3
    $region8: #{tpu_custom_call.1} parent=1 // loop_exit
      _
    %405 = vsyncpa [#allocation3], 1
    %s406 = scalar_lea.sflag [#allocation3], 1
    %407 = vsyncpa %s406, 1
    %408 = vsyncpa [#allocation6], 1
    %409 = vsyncpa [#allocation4], 1
    %s410 = scalar_lea.sflag [#allocation4], 1
    %411 = vsyncpa %s410, 1

</llo_original>
